<compile_context>
chip_gen: v6e
topology: v6e:2x2x1
jax: 0.10.0
libtpu: 0.0.40
codegen_flags: <defaults>
</compile_context>

<pallas_src>
import jax
import jax.numpy as jnp
from jax.experimental import pallas as pl
from jax.experimental.pallas import tpu as pltpu


def _round_up(x, m):
    return ((x + m - 1) // m) * m


def _model_kernel(x1_ref, x2_ref, x3_ref, o_ref):
    x1 = x1_ref[...]
    x2 = x2_ref[...]
    x3 = x3_ref[...]
    # Fuse the three matmuls into a single MXU pass:
    #   out = x1@x2 + x3@x1 + x3@x2
    #       = x1@x2 + x3@(x1 + x2)              (VPU add, essentially free)
    #       = [x1 | x3] @ [[x2], [x1 + x2]]     (one dot, K doubled)
    lhs = jnp.concatenate([x1, x3], axis=1)        # (Sp, 2*Sp)
    rhs = jnp.concatenate([x2, x1 + x2], axis=0)   # (2*Sp, Sp)
    o_ref[...] = jnp.dot(
        lhs, rhs, preferred_element_type=jnp.float32
    ).astype(o_ref.dtype)


def model_forward(x1, x2, x3):
    """Fused Pallas TPU forward for: (x1 @ x2) + (x3 @ x1 + x3 @ x2)."""
    S = x1.shape[0]
    assert x1.shape == x2.shape == x3.shape == (S, S), (
        "forward only type-checks for square same-size matrices")
    out_dtype = jnp.result_type(x1.dtype, x2.dtype, x3.dtype)

    # Pad up to a 128-multiple: tile-aligned concats/dot and a lane-dense
    # output store.  Exact math (zero rows/cols contribute nothing).
    Sp = max(_round_up(S, 128), 128)

    def _pad(a):
        return jnp.pad(a, ((0, Sp - S), (0, Sp - S)))

    x1p, x2p, x3p = _pad(x1), _pad(x2), _pad(x3)

    # Whole (padded) problem is one VMEM tile -> no grid needed.
    # TODO(synk): if S ever grows, switch to a tiled (tm,tn,tk) grid with an
    # f32 VMEM accumulator, budgeting tiles against v7x's 64 MiB VMEM.
    assert 8 * Sp * Sp * 4 < 24 * 1024 * 1024, (
        "single-tile path only; add a real grid for large S")

    out_p = pl.pallas_call(
        _model_kernel,
        out_shape=jax.ShapeDtypeStruct((Sp, Sp), out_dtype),
        in_specs=[pl.BlockSpec(memory_space=pltpu.VMEM)] * 3,
        out_specs=pl.BlockSpec(memory_space=pltpu.VMEM),
    )(x1p, x2p, x3p)

    # Slice back to the logical output size (layout plumbing only).
    return out_p[:S, :S]


if __name__ == "__main__":
    S = 8  # small square size (original 7x3 / 3x7 shapes are inconsistent)
    key = jax.random.PRNGKey(0)
    k1, k2, k3 = jax.random.split(key, 3)
    x1 = jax.random.normal(k1, (S, S), dtype=jnp.float32)
    x2 = jax.random.normal(k2, (S, S), dtype=jnp.float32)
    x3 = jax.random.normal(k3, (S, S), dtype=jnp.float32)

    out = jax.block_until_ready(model_forward(x1, x2, x3))

    # Pure-JAX reference check (3-matmul form of the original module).
    ref = x1 @ x2 + (x3 @ x1 + x3 @ x2)
    assert out.shape == ref.shape and out.dtype == ref.dtype
    assert jnp.allclose(out, ref, atol=1e-5, rtol=1e-5), "mismatch vs reference"

    print("KERNEL_OK")
</pallas_src>

<mosaic_0001>
module attributes {stable_mosaic.version = 11 : i64} {
  func.func @_model_kernel(%arg0: memref<128x128xf32, #tpu.memory_space<vmem>>, %arg1: memref<128x128xf32, #tpu.memory_space<vmem>>, %arg2: memref<128x128xf32, #tpu.memory_space<vmem>>, %arg3: memref<128x128xf32, #tpu.memory_space<vmem>>) attributes {dimension_semantics = [], scalar_prefetch = 0 : i64, scratch_operands = 0 : i64, tpu.core_type = #tpu.core_type<tc>} {
    %c0 = arith.constant 0 : index
    %c0_0 = arith.constant 0 : index
    %0 = vector.load %arg0[%c0, %c0_0] : memref<128x128xf32, #tpu.memory_space<vmem>>, vector<128x128xf32>
    %c0_1 = arith.constant 0 : index
    %c0_2 = arith.constant 0 : index
    %1 = vector.load %arg1[%c0_1, %c0_2] : memref<128x128xf32, #tpu.memory_space<vmem>>, vector<128x128xf32>
    %c0_3 = arith.constant 0 : index
    %c0_4 = arith.constant 0 : index
    %2 = vector.load %arg2[%c0_3, %c0_4] : memref<128x128xf32, #tpu.memory_space<vmem>>, vector<128x128xf32>
    %3 = tpu.concatenate %0, %2 in 1 : vector<128x128xf32>, vector<128x128xf32> -> vector<128x256xf32>
    %4 = arith.addf %0, %1 : vector<128x128xf32>
    %5 = tpu.concatenate %1, %4 in 0 : vector<128x128xf32>, vector<128x128xf32> -> vector<256x128xf32>
    %cst = arith.constant dense<0.000000e+00> : vector<128x128xf32>
    %6 = tpu.matmul %3, %5, %cst {dimension_numbers = #tpu.dot_dimension_numbers<[1], [0], [0], [1], [0, 0, 1, 1], [], []>} : vector<128x256xf32>, vector<256x128xf32>, vector<128x128xf32> -> vector<128x128xf32>
    %c0_5 = arith.constant 0 : index
    %c0_6 = arith.constant 0 : index
    %7 = vector.load %arg3[%c0_5, %c0_6] : memref<128x128xf32, #tpu.memory_space<vmem>>, vector<128x128xf32>
    tpu.vector_store %arg3[%c0_5, %c0_6], %6 {strides = array<i32>} : memref<128x128xf32, #tpu.memory_space<vmem>>, vector<128x128xf32>,
    return
  }
}

</mosaic_0001>

<llo_original>
// kernel: tpu_custom_call.1
$region0: #{tpu_custom_call.1}
  #allocation0 [shape = 'u32[]', space=smem, size = 0x4, offset = 0x4, fixed_abs, tag = 'smem constant byte address 0x4 - core index']
  #allocation1 [shape = 'u32[144,128]{1,0:T(1,128)}', space=vmem, size = 0x12000, scoped, tag = 'internal scratch']
  %s0 = inlined_call_operand.hbm [shape: f32[128,128], index: 0, kind: input, shape index: {}]
  %s1 = inlined_call_operand.hbm [shape: f32[128,128], index: 1, kind: input, shape index: {}]
  %s2 = inlined_call_operand.hbm [shape: f32[128,128], index: 2, kind: input, shape index: {}]
  %s3 = inlined_call_operand.hbm [shape: f32[128,128], index: 3, kind: output, shape index: {}]
  %s4 = sld [smem:[#allocation0]]
  $region34: #{tpu_custom_call.1} parent=0
    _
  %s6 = ssub.s32 1, %s4
  %s7 = scalar_select 0, %s6, %s4
  $region1: #{tpu_custom_call.1} parent=0
    #allocation2 [shape = 'u8[65536]{0}', space=vmem, size = 0x10000, scoped, tag = 'input window, operand 0, single buffered']
    #allocation3 [shape = 's32[1]{0}', space=sflag, size = 0x4, scoped, tag = 'scoped memory for tpu_custom_call.1']
    #allocation4 [shape = 's32[1]{0}', space=sflag, size = 0x4, scoped, tag = 'scoped memory for tpu_custom_call.1']
    #allocation5 [shape = 'u8[65536]{0}', space=vmem, size = 0x10000, scoped, tag = 'input window, operand 1, single buffered']
    #allocation6 [shape = 's32[1]{0}', space=sflag, size = 0x4, scoped, tag = 'scoped memory for tpu_custom_call.1']
    #allocation7 [shape = 'u8[65536]{0}', space=vmem, size = 0x10000, scoped, tag = 'input window, operand 2, single buffered']
    #allocation8 [shape = 'u8[65536]{0}', space=vmem, size = 0x10000, scoped, tag = 'output window, operand 0, single buffered']
    %8 = vsyncpa [#allocation3], 0
    %9 = vsyncpa [#allocation6], 0
    %10 = vsyncpa [#allocation4], 0
    // Predicated region
    $region2: #{tpu_custom_call.1} parent=1 // pred_check
      _
    $region3: #{tpu_custom_call.1} parent=1 // pred_check_branch
      %12 = sbr.rel (0) target = $region5
    $region4: #{tpu_custom_call.1} parent=1 // pred_region
      %s14 = ssub.s32 2048, 2048
      %15 = vsyncadd [#allocation3], %s14
      %s16 = sshll.u32 [#allocation2], 4
      %s17 = int_to_ptr.vmem [resolvable:$true] %s16
      %22 = dma.hbm_to_vmem [thread:$0]  %s0, 2048, %s17, [#allocation3], 128, 128, 8
    $region5: #{tpu_custom_call.1} parent=1 // pred_fallthru
      _
    // Predicated region
    $region6: #{tpu_custom_call.1} parent=1 // pred_check
      _
    $region7: #{tpu_custom_call.1} parent=1 // pred_check_branch
      %24 = sbr.rel (0) target = $region9
    $region8: #{tpu_custom_call.1} parent=1 // pred_region
      %s26 = ssub.s32 2048, 2048
      %27 = vsyncadd [#allocation6], %s26
      %s28 = sshll.u32 [#allocation5], 4
      %s29 = int_to_ptr.vmem [resolvable:$true] %s28
      %34 = dma.hbm_to_vmem [thread:$0]  %s1, 2048, %s29, [#allocation6], 128, 128, 8
    $region9: #{tpu_custom_call.1} parent=1 // pred_fallthru
      _
    // Predicated region
    $region10: #{tpu_custom_call.1} parent=1 // pred_check
      _
    $region11: #{tpu_custom_call.1} parent=1 // pred_check_branch
      %36 = sbr.rel (0) target = $region13
    $region12: #{tpu_custom_call.1} parent=1 // pred_region
      %s38 = ssub.s32 2048, 2048
      %39 = vsyncadd [#allocation6], %s38
      %s40 = sshll.u32 [#allocation7], 4
      %s41 = int_to_ptr.vmem [resolvable:$true] %s40
      %46 = dma.hbm_to_vmem [thread:$0]  %s2, 2048, %s41, [#allocation6], 128, 128, 8
    $region13: #{tpu_custom_call.1} parent=1 // pred_fallthru
      _
    // Predicated region
    $region14: #{tpu_custom_call.1} parent=1 // pred_check
      _
    $region15: #{tpu_custom_call.1} parent=1 // pred_check_branch
      %48 = sbr.rel (0) target = $region17
    $region16: #{tpu_custom_call.1} parent=1 // pred_region
      %49 = dma.done [#allocation3], 2048
    $region17: #{tpu_custom_call.1} parent=1 // pred_fallthru
      _
    // Predicated region
    $region18: #{tpu_custom_call.1} parent=1 // pred_check
      _
    $region19: #{tpu_custom_call.1} parent=1 // pred_check_branch
      %51 = sbr.rel (0) target = $region21
    $region20: #{tpu_custom_call.1} parent=1 // pred_region
      %52 = dma.done [#allocation6], 2048
    $region21: #{tpu_custom_call.1} parent=1 // pred_fallthru
      _
    // Predicated region
    $region22: #{tpu_custom_call.1} parent=1 // pred_check
      _
    $region23: #{tpu_custom_call.1} parent=1 // pred_check_branch
      %54 = sbr.rel (0) target = $region25
    $region24: #{tpu_custom_call.1} parent=1 // pred_region
      %55 = dma.done [#allocation6], 2048
    $region25: #{tpu_custom_call.1} parent=1 // pred_fallthru
      _
    %v56 = vld [vmem:[#allocation2] sm:$0xff]
    %v57 = vld [vmem:[#allocation2 + $0x8] sm:$0xff]
    %v58 = vld [vmem:[#allocation2 + $0x10] sm:$0xff]
    %v59 = vld [vmem:[#allocation2 + $0x18] sm:$0xff]
    %v60 = vld [vmem:[#allocation2 + $0x20] sm:$0xff]
    %v61 = vld [vmem:[#allocation2 + $0x28] sm:$0xff]
    %v62 = vld [vmem:[#allocation2 + $0x30] sm:$0xff]
    %v63 = vld [vmem:[#allocation2 + $0x38] sm:$0xff]
    %v64 = vld [vmem:[#allocation2 + $0x40] sm:$0xff]
    %v65 = vld [vmem:[#allocation2 + $0x48] sm:$0xff]
    %v66 = vld [vmem:[#allocation2 + $0x50] sm:$0xff]
    %v67 = vld [vmem:[#allocation2 + $0x58] sm:$0xff]
    %v68 = vld [vmem:[#allocation2 + $0x60] sm:$0xff]
    %v69 = vld [vmem:[#allocation2 + $0x68] sm:$0xff]
    %v70 = vld [vmem:[#allocation2 + $0x70] sm:$0xff]
    %v71 = vld [vmem:[#allocation2 + $0x78] sm:$0xff]
    %v72 = vld [vmem:[#allocation5] sm:$0xff]
    %v73 = vld [vmem:[#allocation5 + $0x8] sm:$0xff]
    %v74 = vld [vmem:[#allocation5 + $0x10] sm:$0xff]
    %v75 = vld [vmem:[#allocation5 + $0x18] sm:$0xff]
    %v76 = vld [vmem:[#allocation5 + $0x20] sm:$0xff]
    %v77 = vld [vmem:[#allocation5 + $0x28] sm:$0xff]
    %v78 = vld [vmem:[#allocation5 + $0x30] sm:$0xff]
    %v79 = vld [vmem:[#allocation5 + $0x38] sm:$0xff]
    %v80 = vld [vmem:[#allocation5 + $0x40] sm:$0xff]
    %v81 = vld [vmem:[#allocation5 + $0x48] sm:$0xff]
    %v82 = vld [vmem:[#allocation5 + $0x50] sm:$0xff]
    %v83 = vld [vmem:[#allocation5 + $0x58] sm:$0xff]
    %v84 = vld [vmem:[#allocation5 + $0x60] sm:$0xff]
    %v85 = vld [vmem:[#allocation5 + $0x68] sm:$0xff]
    %v86 = vld [vmem:[#allocation5 + $0x70] sm:$0xff]
    %v87 = vld [vmem:[#allocation5 + $0x78] sm:$0xff]
    %v88 = vld [vmem:[#allocation7] sm:$0xff]
    %v89 = vld [vmem:[#allocation7 + $0x8] sm:$0xff]
    %v90 = vld [vmem:[#allocation7 + $0x10] sm:$0xff]
    %v91 = vld [vmem:[#allocation7 + $0x18] sm:$0xff]
    %v92 = vld [vmem:[#allocation7 + $0x20] sm:$0xff]
    %v93 = vld [vmem:[#allocation7 + $0x28] sm:$0xff]
    %v94 = vld [vmem:[#allocation7 + $0x30] sm:$0xff]
    %v95 = vld [vmem:[#allocation7 + $0x38] sm:$0xff]
    %v96 = vld [vmem:[#allocation7 + $0x40] sm:$0xff]
    %v97 = vld [vmem:[#allocation7 + $0x48] sm:$0xff]
    %v98 = vld [vmem:[#allocation7 + $0x50] sm:$0xff]
    %v99 = vld [vmem:[#allocation7 + $0x58] sm:$0xff]
    %v100 = vld [vmem:[#allocation7 + $0x60] sm:$0xff]
    %v101 = vld [vmem:[#allocation7 + $0x68] sm:$0xff]
    %v102 = vld [vmem:[#allocation7 + $0x70] sm:$0xff]
    %v103 = vld [vmem:[#allocation7 + $0x78] sm:$0xff]
    %v104 = vadd.f32 %v56, %v72
    %v105 = vadd.f32 %v57, %v73
    %v106 = vadd.f32 %v58, %v74
    %v107 = vadd.f32 %v59, %v75
    %v108 = vadd.f32 %v60, %v76
    %v109 = vadd.f32 %v61, %v77
    %v110 = vadd.f32 %v62, %v78
    %v111 = vadd.f32 %v63, %v79
    %v112 = vadd.f32 %v64, %v80
    %v113 = vadd.f32 %v65, %v81
    %v114 = vadd.f32 %v66, %v82
    %v115 = vadd.f32 %v67, %v83
    %v116 = vadd.f32 %v68, %v84
    %v117 = vadd.f32 %v69, %v85
    %v118 = vadd.f32 %v70, %v86
    %v119 = vadd.f32 %v71, %v87
    %120 = vmatprep.subr.mxu0 0.0
    %121 = vmatpush1.msra.mxu0 %v87
    %122 = vmatprep.subr.mxu0 0.0
    %123 = vmatpush1.msra.mxu0 %v86
    %124 = vmatprep.subr.mxu0 0.0
    %125 = vmatpush1.msra.mxu0 %v85
    %126 = vmatprep.subr.mxu0 0.0
    %127 = vmatpush1.msra.mxu0 %v84
    %128 = vmatprep.subr.mxu0 0.0
    %129 = vmatpush1.msra.mxu0 %v83
    %130 = vmatprep.subr.mxu0 0.0
    %131 = vmatpush1.msra.mxu0 %v82
    %132 = vmatprep.subr.mxu0 0.0
    %133 = vmatpush1.msra.mxu0 %v81
    %134 = vmatprep.subr.mxu0 0.0
    %135 = vmatpush1.msra.mxu0 %v80
    %136 = vmatprep.subr.mxu0 0.0
    %137 = vmatpush1.msra.mxu0 %v79
    %138 = vmatprep.subr.mxu0 0.0
    %139 = vmatpush1.msra.mxu0 %v78
    %140 = vmatprep.subr.mxu0 0.0
    %141 = vmatpush1.msra.mxu0 %v77
    %142 = vmatprep.subr.mxu0 0.0
    %143 = vmatpush1.msra.mxu0 %v76
    %144 = vmatprep.subr.mxu0 0.0
    %145 = vmatpush1.msra.mxu0 %v75
    %146 = vmatprep.subr.mxu0 0.0
    %147 = vmatpush1.msra.mxu0 %v74
    %148 = vmatprep.subr.mxu0 0.0
    %149 = vmatpush1.msra.mxu0 %v73
    %150 = vmatprep.subr.mxu0 0.0
    %151 = vmatpush1.msra.mxu0 %v72
    %152 = vmatprep.subr.mxu0 0.0
    %153 = vmatpush2.msra.mxu0 %v119
    %154 = vmatprep.subr.mxu0 0.0
    %155 = vmatpush2.msra.mxu0 %v118
    %156 = vmatprep.subr.mxu0 0.0
    %157 = vmatpush2.msra.mxu0 %v117
    %158 = vmatprep.subr.mxu0 0.0
    %159 = vmatpush2.msra.mxu0 %v116
    %160 = vmatprep.subr.mxu0 0.0
    %161 = vmatpush2.msra.mxu0 %v115
    %162 = vmatprep.subr.mxu0 0.0
    %163 = vmatpush2.msra.mxu0 %v114
    %164 = vmatprep.subr.mxu0 0.0
    %165 = vmatpush2.msra.mxu0 %v113
    %166 = vmatprep.subr.mxu0 0.0
    %167 = vmatpush2.msra.mxu0 %v112
    %168 = vmatprep.subr.mxu0 0.0
    %169 = vmatpush2.msra.mxu0 %v111
    %170 = vmatprep.subr.mxu0 0.0
    %171 = vmatpush2.msra.mxu0 %v110
    %172 = vmatprep.subr.mxu0 0.0
    %173 = vmatpush2.msra.mxu0 %v109
    %174 = vmatprep.subr.mxu0 0.0
    %175 = vmatpush2.msra.mxu0 %v108
    %176 = vmatprep.subr.mxu0 0.0
    %177 = vmatpush2.msra.mxu0 %v107
    %178 = vmatprep.subr.mxu0 0.0
    %179 = vmatpush2.msra.mxu0 %v106
    %180 = vmatprep.subr.mxu0 0.0
    %181 = vmatpush2.msra.mxu0 %v105
    %182 = vmatprep.subr.mxu0 0.0
    %183 = vmatpush2.msra.mxu0 %v104
    %184 = vmatprep.mubr.f32.mxu0 %v88
    %185 = vmatmul.mubr.f32.gmra.mxu0 %v56
    %v186 = vpop.f32.mrf.mxu0
    %v187 = vadd.f32 0.0, %v186
    %v188 = vpop.f32.mrf.mxu0
    %189 = vmatprep.mubr.f32.mxu0 %v89
    %190 = vmatmul.mubr.f32.gmra.mxu0 %v57
    %v191 = vpop.f32.mrf.mxu0
    %v192 = vadd.f32 0.0, %v191
    %v193 = vpop.f32.mrf.mxu0
    %194 = vmatprep.mubr.f32.mxu0 %v90
    %195 = vmatmul.mubr.f32.gmra.mxu0 %v58
    %v196 = vpop.f32.mrf.mxu0
    %v197 = vadd.f32 0.0, %v196
    %v198 = vpop.f32.mrf.mxu0
    %199 = vmatprep.mubr.f32.mxu0 %v91
    %200 = vmatmul.mubr.f32.gmra.mxu0 %v59
    %v201 = vpop.f32.mrf.mxu0
    %v202 = vadd.f32 0.0, %v201
    %v203 = vpop.f32.mrf.mxu0
    %204 = vmatprep.mubr.f32.mxu0 %v92
    %205 = vmatmul.mubr.f32.gmra.mxu0 %v60
    %v206 = vpop.f32.mrf.mxu0
    %v207 = vadd.f32 0.0, %v206
    %v208 = vpop.f32.mrf.mxu0
    %209 = vmatprep.mubr.f32.mxu0 %v93
    %210 = vmatmul.mubr.f32.gmra.mxu0 %v61
    %v211 = vpop.f32.mrf.mxu0
    %v212 = vadd.f32 0.0, %v211
    %v213 = vpop.f32.mrf.mxu0
    %214 = vmatprep.mubr.f32.mxu0 %v94
    %215 = vmatmul.mubr.f32.gmra.mxu0 %v62
    %v216 = vpop.f32.mrf.mxu0
    %v217 = vadd.f32 0.0, %v216
    %v218 = vpop.f32.mrf.mxu0
    %219 = vmatprep.mubr.f32.mxu0 %v95
    %220 = vmatmul.mubr.f32.gmra.mxu0 %v63
    %v221 = vpop.f32.mrf.mxu0
    %v222 = vadd.f32 0.0, %v221
    %v223 = vpop.f32.mrf.mxu0
    %224 = vmatprep.mubr.f32.mxu0 %v96
    %225 = vmatmul.mubr.f32.gmra.mxu0 %v64
    %v226 = vpop.f32.mrf.mxu0
    %v227 = vadd.f32 0.0, %v226
    %v228 = vpop.f32.mrf.mxu0
    %229 = vmatprep.mubr.f32.mxu0 %v97
    %230 = vmatmul.mubr.f32.gmra.mxu0 %v65
    %v231 = vpop.f32.mrf.mxu0
    %v232 = vadd.f32 0.0, %v231
    %v233 = vpop.f32.mrf.mxu0
    %234 = vmatprep.mubr.f32.mxu0 %v98
    %235 = vmatmul.mubr.f32.gmra.mxu0 %v66
    %v236 = vpop.f32.mrf.mxu0
    %v237 = vadd.f32 0.0, %v236
    %v238 = vpop.f32.mrf.mxu0
    %239 = vmatprep.mubr.f32.mxu0 %v99
    %240 = vmatmul.mubr.f32.gmra.mxu0 %v67
    %v241 = vpop.f32.mrf.mxu0
    %v242 = vadd.f32 0.0, %v241
    %v243 = vpop.f32.mrf.mxu0
    %244 = vmatprep.mubr.f32.mxu0 %v100
    %245 = vmatmul.mubr.f32.gmra.mxu0 %v68
    %v246 = vpop.f32.mrf.mxu0
    %v247 = vadd.f32 0.0, %v246
    %v248 = vpop.f32.mrf.mxu0
    %249 = vmatprep.mubr.f32.mxu0 %v101
    %250 = vmatmul.mubr.f32.gmra.mxu0 %v69
    %v251 = vpop.f32.mrf.mxu0
    %v252 = vadd.f32 0.0, %v251
    %v253 = vpop.f32.mrf.mxu0
    %254 = vmatprep.mubr.f32.mxu0 %v102
    %255 = vmatmul.mubr.f32.gmra.mxu0 %v70
    %v256 = vpop.f32.mrf.mxu0
    %v257 = vadd.f32 0.0, %v256
    %v258 = vpop.f32.mrf.mxu0
    %259 = vmatprep.mubr.f32.mxu0 %v103
    %260 = vmatmul.mubr.f32.gmra.mxu0 %v71
    %v261 = vpop.f32.mrf.mxu0
    %v262 = vadd.f32 0.0, %v261
    %v263 = vpop.f32.mrf.mxu0
    %264 = vdwg.mxu0
    %265 = vst [vmem:[#allocation8] sm:$0xff] %v187
    %266 = vst [vmem:[#allocation8 + $0x8] sm:$0xff] %v192
    %267 = vst [vmem:[#allocation8 + $0x10] sm:$0xff] %v197
    %268 = vst [vmem:[#allocation8 + $0x18] sm:$0xff] %v202
    %269 = vst [vmem:[#allocation8 + $0x20] sm:$0xff] %v207
    %270 = vst [vmem:[#allocation8 + $0x28] sm:$0xff] %v212
    %271 = vst [vmem:[#allocation8 + $0x30] sm:$0xff] %v217
    %272 = vst [vmem:[#allocation8 + $0x38] sm:$0xff] %v222
    %273 = vst [vmem:[#allocation8 + $0x40] sm:$0xff] %v227
    %274 = vst [vmem:[#allocation8 + $0x48] sm:$0xff] %v232
    %275 = vst [vmem:[#allocation8 + $0x50] sm:$0xff] %v237
    %276 = vst [vmem:[#allocation8 + $0x58] sm:$0xff] %v242
    %277 = vst [vmem:[#allocation8 + $0x60] sm:$0xff] %v247
    %278 = vst [vmem:[#allocation8 + $0x68] sm:$0xff] %v252
    %279 = vst [vmem:[#allocation8 + $0x70] sm:$0xff] %v257
    %280 = vst [vmem:[#allocation8 + $0x78] sm:$0xff] %v262
    // Predicated region
    $region26: #{tpu_custom_call.1} parent=1 // pred_check
      _
    $region27: #{tpu_custom_call.1} parent=1 // pred_check_branch
      %282 = sbr.rel (0) target = $region29
    $region28: #{tpu_custom_call.1} parent=1 // pred_region
      %s284 = ssub.s32 2048, 2048
      %285 = vsyncadd [#allocation4], %s284
      %s286 = sshll.u32 [#allocation8], 4
      %s287 = int_to_ptr.vmem [resolvable:$true] %s286
      %292 = dma.vmem_to_hbm [thread:$0]  %s287, 2048, %s3, [#allocation4], 128, 128, 8
    $region29: #{tpu_custom_call.1} parent=1 // pred_fallthru
      _
    // Predicated region
    $region30: #{tpu_custom_call.1} parent=1 // pred_check
      _
    $region31: #{tpu_custom_call.1} parent=1 // pred_check_branch
      %294 = sbr.rel (0) target = $region33
    $region32: #{tpu_custom_call.1} parent=1 // pred_region
      %295 = dma.done [#allocation4], 2048
    $region33: #{tpu_custom_call.1} parent=1 // pred_fallthru
      _
    %296 = vsyncpa [#allocation3], 1
    %297 = vsyncpa [#allocation6], 1
    %298 = vsyncpa [#allocation4], 1

</llo_original>
